<compile_context>
chip_gen: v7x
topology: tpu7x:2x2x1
jax: 0.10.0
libtpu: 0.0.40
codegen_flags: <defaults>
</compile_context>

<pallas_src>
import jax
import jax.numpy as jnp
from jax.experimental import pallas as pl
from jax.experimental.pallas import tpu as pltpu


def _pose_enc_dec_kernel(x_ref, k_enc_ref, b1_ref, k_up_ref, b2_ref, out_ref):
    # x_ref:     (TB, J*C_in)          lane-dense batch slab (f32 or bf16)
    # k_enc_ref: (J*C_in, J*H)         kron(A.T, W_enc)  -- fused adjacency+encoder
    # b1_ref:    (1, J*H)              tiled encoder bias (f32)
    # k_up_ref:  (J*H, J*2*C_out)      kron(I_J, W_up)
    # b2_ref:    (1, J*2*C_out)        tiled upsampling bias (f32)
    # out_ref:   (TB, J*2*C_out)       lane-dense output slab (f32)
    xf = x_ref[...]

    # pose_embedding: ReLU(A @ x @ W_enc + b_enc), one matmul in the flat layout.
    h = jnp.dot(xf, k_enc_ref[...], preferred_element_type=jnp.float32)
    h = jnp.maximum(h + b1_ref[...], 0.0)                       # f32 bias-add + ReLU

    # upsampling: per-joint linear expansion to 2*C_out channels.
    y = jnp.dot(h.astype(k_up_ref.dtype), k_up_ref[...],
                preferred_element_type=jnp.float32)
    out_ref[...] = (y + b2_ref[...]).astype(out_ref.dtype)      # unmasked lane-dense store


_MXU_M = 256       # full MXU M tile on v6e/v7x (also fine on v5e's 128-row MXU)
_TB_CAP = 1024     # hard cap so h / y intermediates stay modest


def _vmem_budget_bytes():
    # Conservative per-kernel working-set budget, gated per TPU generation.
    try:
        cap = int(pltpu.get_tpu_info().vmem_capacity_bytes)
    except Exception:
        cap = 64 << 20                    # v7x per-TensorCore VMEM (smallest gen)
    return min(cap // 2, 40 << 20)


def _choose_batch_tile(B, J, C_in, H, two_c_out, avail_bytes, in_itemsize):
    # Batch-proportional VMEM per row: double-buffered x and out blocks plus the
    # f32 h / y intermediates.
    row_bytes = (2 * J * C_in * in_itemsize      # x block, double-buffered
                 + 2 * J * two_c_out * 4         # out block, double-buffered
                 + J * H * 4                     # h intermediate
                 + J * two_c_out * 4)            # y intermediate
    tb_fit = max(8, int(avail_bytes) // max(row_bytes, 1))
    tb_fit = min(tb_fit, _TB_CAP)
    b_pad = max(8, pl.cdiv(B, 8) * 8)            # sublane-aligned batch
    if b_pad <= tb_fit:
        return int(b_pad)                        # whole batch in ONE grid step
    # Multiple steps: give each step a full MXU M tile when it fits.
    if tb_fit >= _MXU_M:
        return int((tb_fit // _MXU_M) * _MXU_M)
    return int((tb_fit // 8) * 8)


def simple_pose_encoder_decoder(x, A, w1, b1, w2, b2, *, bf16_batch_threshold=1024):
    """x: (B, J, C_in), A: (J, J).  Returns decoded: (B, 2*J, C_out) float32."""
    B, J, C_in = x.shape
    H = w1.shape[1]
    two_c_out = w2.shape[1]
    assert two_c_out % 2 == 0
    C_out = two_c_out // 2
    f32 = jnp.float32

    # Lift per-joint operators to the flat (J*C) layout (cheap one-time XLA ops).
    # Adjacency and encoder weight fuse into a single operator:
    #   kron(A.T, I_Cin) @ kron(I_J, W_enc) == kron(A.T, W_enc)
    k_enc = jnp.kron(A.T.astype(f32), w1.astype(f32))             # (J*C_in, J*H)
    k_up = jnp.kron(jnp.eye(J, dtype=f32), w2.astype(f32))        # (J*H, J*2*C_out)
    b1f = jnp.tile(b1.astype(f32), J)[None, :]                    # (1, J*H)
    b2f = jnp.tile(b2.astype(f32), J)[None, :]                    # (1, J*2*C_out)

    # bf16 matmul operands only pay off once the kernel is genuinely MXU/DMA-bound.
    use_bf16 = B >= bf16_batch_threshold
    mm_dtype = jnp.bfloat16 if use_bf16 else f32
    k_enc = k_enc.astype(mm_dtype)
    k_up = k_up.astype(mm_dtype)

    # Lane-dense flat input; pad the batch to a whole number of tiles.
    xf = x.astype(mm_dtype).reshape(B, J * C_in)
    in_itemsize = xf.dtype.itemsize

    weight_bytes = int(k_enc.size) * int(k_enc.dtype.itemsize) \
        + int(k_up.size) * int(k_up.dtype.itemsize) \
        + int(b1f.size) * 4 + int(b2f.size) * 4

    budget = _vmem_budget_bytes()
    tb = _choose_batch_tile(B, J, C_in, H, two_c_out,
                            avail_bytes=max(budget - weight_bytes, 1 << 20),
                            in_itemsize=in_itemsize)
    Bp = pl.cdiv(B, tb) * tb
    if Bp != B:
        xf = jnp.pad(xf, ((0, Bp - B), (0, 0)))

    # Size the scoped-VMEM limit against the real footprint (weights are single
    # buffered, x/out blocks double-buffered, plus h/y temporaries).
    block_bytes = tb * (2 * J * C_in * in_itemsize
                        + 2 * J * two_c_out * 4
                        + J * H * 4 + J * two_c_out * 4)
    footprint = weight_bytes + block_bytes
    vmem_limit = int(min(max(2 * footprint, 32 << 20), 48 << 20))

    def _const_spec(shape):
        # Constant-index operand: fetched once, single-buffered.
        return pl.BlockSpec(shape, lambda i: (0, 0), pipeline_mode=pl.Buffered(1))

    out_flat = pl.pallas_call(
        _pose_enc_dec_kernel,
        out_shape=jax.ShapeDtypeStruct((Bp, J * two_c_out), f32),
        grid_spec=pltpu.PrefetchScalarGridSpec(
            num_scalar_prefetch=0,
            grid=(Bp // tb,),
            in_specs=[
                pl.BlockSpec((tb, J * C_in), lambda i: (i, 0)),
                _const_spec((J * C_in, J * H)),
                _const_spec((1, J * H)),
                _const_spec((J * H, J * two_c_out)),
                _const_spec((1, J * two_c_out)),
            ],
            out_specs=pl.BlockSpec((tb, J * two_c_out), lambda i: (i, 0)),
        ),
        compiler_params=pltpu.CompilerParams(
            dimension_semantics=("parallel",),
            vmem_limit_bytes=vmem_limit),
    )(xf, k_enc, b1f, k_up, b2f)

    # Row-major view: (B, J*2*C_out) == (B, J, 2*C_out); x2 joint upsample ->
    # (B, 2*J, C_out).  Assumes the upsampler splits each joint's 2*C_out
    # channels as [joint 2j | joint 2j+1], matching the reference below.
    return out_flat[:B].reshape(B, 2 * J, C_out)


def _reference(x, A, w1, b1, w2, b2):
    h = jnp.maximum(jnp.einsum("jk,bkc->bjc", A, x) @ w1 + b1, 0.0)
    y = h @ w2 + b2
    B, J, _ = x.shape
    return y.reshape(B, 2 * J, -1)


if __name__ == "__main__":
    key = jax.random.PRNGKey(0)
    kx, ka, kw1, kb1, kw2, kb2 = jax.random.split(key, 6)

    B, J, C_in, H, C_out = 16, 16, 4, 32, 8

    x = jax.random.normal(kx, (B, J, C_in), dtype=jnp.float32)
    A = jax.random.uniform(ka, (J, J), dtype=jnp.float32)
    A = A / jnp.sum(A, axis=-1, keepdims=True)  # row-normalized adjacency

    w1 = jax.random.normal(kw1, (C_in, H), dtype=jnp.float32) * 0.1
    b1 = jax.random.normal(kb1, (H,), dtype=jnp.float32) * 0.01
    w2 = jax.random.normal(kw2, (H, 2 * C_out), dtype=jnp.float32) * 0.1
    b2 = jax.random.normal(kb2, (2 * C_out,), dtype=jnp.float32) * 0.01

    decoded = simple_pose_encoder_decoder(x, A, w1, b1, w2, b2)
    decoded = jax.block_until_ready(decoded)

    ref = _reference(x, A, w1, b1, w2, b2)
    assert decoded.shape == (B, 2 * J, C_out), decoded.shape
    assert jnp.allclose(decoded, ref, atol=1e-5, rtol=1e-5), "mismatch vs reference"

    print("KERNEL_OK")
</pallas_src>

<mosaic_0001>
module attributes {stable_mosaic.version = 11 : i64} {
  func.func @_pose_enc_dec_kernel(%arg0: i32, %arg1: memref<16x64xf32, #tpu.memory_space<vmem>>, %arg2: memref<64x512xf32, #tpu.memory_space<vmem>>, %arg3: memref<1x512xf32, #tpu.memory_space<vmem>>, %arg4: memref<512x256xf32, #tpu.memory_space<vmem>>, %arg5: memref<1x256xf32, #tpu.memory_space<vmem>>, %arg6: memref<16x256xf32, #tpu.memory_space<vmem>>) attributes {dimension_semantics = [#tpu.dimension_semantics<parallel>], iteration_bounds = array<i64: 1>, scalar_prefetch = 0 : i64, scratch_operands = 0 : i64, tpu.core_type = #tpu.core_type<tc>, window_params = [{transform_indices = @transform_0, window_bounds = array<i64: 16, 64>}, {pipeline_mode = #tpu.pipeline_mode<synchronous>, transform_indices = @transform_1, window_bounds = array<i64: 64, 512>}, {pipeline_mode = #tpu.pipeline_mode<synchronous>, transform_indices = @transform_2, window_bounds = array<i64: 1, 512>}, {pipeline_mode = #tpu.pipeline_mode<synchronous>, transform_indices = @transform_3, window_bounds = array<i64: 512, 256>}, {pipeline_mode = #tpu.pipeline_mode<synchronous>, transform_indices = @transform_4, window_bounds = array<i64: 1, 256>}, {transform_indices = @transform_5, window_bounds = array<i64: 16, 256>}]} {
    %c0 = arith.constant 0 : index
    %c0_0 = arith.constant 0 : index
    %0 = vector.load %arg1[%c0, %c0_0] : memref<16x64xf32, #tpu.memory_space<vmem>>, vector<16x64xf32>
    %c0_1 = arith.constant 0 : index
    %c0_2 = arith.constant 0 : index
    %1 = vector.load %arg2[%c0_1, %c0_2] : memref<64x512xf32, #tpu.memory_space<vmem>>, vector<64x512xf32>
    %cst = arith.constant dense<0.000000e+00> : vector<16x512xf32>
    %2 = tpu.matmul %0, %1, %cst {dimension_numbers = #tpu.dot_dimension_numbers<[1], [0], [0], [1], [0, 0, 1, 1], [], []>} : vector<16x64xf32>, vector<64x512xf32>, vector<16x512xf32> -> vector<16x512xf32>
    %c0_3 = arith.constant 0 : index
    %c0_4 = arith.constant 0 : index
    %3 = vector.load %arg3[%c0_3, %c0_4] : memref<1x512xf32, #tpu.memory_space<vmem>>, vector<1x512xf32>
    %4 = vector.broadcast %3 : vector<1x512xf32> to vector<16x512xf32>
    %5 = arith.addf %2, %4 : vector<16x512xf32>
    %cst_5 = arith.constant 0.000000e+00 : f32
    %6 = vector.broadcast %cst_5 : f32 to vector<16x512xf32>
    %7 = arith.maximumf %5, %6 : vector<16x512xf32>
    %c0_6 = arith.constant 0 : index
    %c0_7 = arith.constant 0 : index
    %8 = vector.load %arg4[%c0_6, %c0_7] : memref<512x256xf32, #tpu.memory_space<vmem>>, vector<512x256xf32>
    %cst_8 = arith.constant dense<0.000000e+00> : vector<16x256xf32>
    %9 = tpu.matmul %7, %8, %cst_8 {dimension_numbers = #tpu.dot_dimension_numbers<[1], [0], [0], [1], [0, 0, 1, 1], [], []>} : vector<16x512xf32>, vector<512x256xf32>, vector<16x256xf32> -> vector<16x256xf32>
    %c0_9 = arith.constant 0 : index
    %c0_10 = arith.constant 0 : index
    %10 = vector.load %arg5[%c0_9, %c0_10] : memref<1x256xf32, #tpu.memory_space<vmem>>, vector<1x256xf32>
    %11 = vector.broadcast %10 : vector<1x256xf32> to vector<16x256xf32>
    %12 = arith.addf %9, %11 : vector<16x256xf32>
    %c0_11 = arith.constant 0 : index
    %c0_12 = arith.constant 0 : index
    %13 = vector.load %arg6[%c0_11, %c0_12] : memref<16x256xf32, #tpu.memory_space<vmem>>, vector<16x256xf32>
    tpu.vector_store %arg6[%c0_11, %c0_12], %12 {strides = array<i32>} : memref<16x256xf32, #tpu.memory_space<vmem>>, vector<16x256xf32>,
    return
  }
  func.func @transform_0(%arg0: i32) -> (i32, i32) {
    %c0_i32 = arith.constant 0 : i32
    %c0_i32_0 = arith.constant 0 : i32
    return %arg0, %c0_i32 : i32, i32
  }
  func.func @transform_1(%arg0: i32) -> (i32, i32) {
    %c0_i32 = arith.constant 0 : i32
    %c0_i32_0 = arith.constant 0 : i32
    %c0_i32_1 = arith.constant 0 : i32
    return %c0_i32, %c0_i32_0 : i32, i32
  }
  func.func @transform_2(%arg0: i32) -> (i32, i32) {
    %c0_i32 = arith.constant 0 : i32
    %c0_i32_0 = arith.constant 0 : i32
    %c0_i32_1 = arith.constant 0 : i32
    return %c0_i32, %c0_i32_0 : i32, i32
  }
  func.func @transform_3(%arg0: i32) -> (i32, i32) {
    %c0_i32 = arith.constant 0 : i32
    %c0_i32_0 = arith.constant 0 : i32
    %c0_i32_1 = arith.constant 0 : i32
    return %c0_i32, %c0_i32_0 : i32, i32
  }
  func.func @transform_4(%arg0: i32) -> (i32, i32) {
    %c0_i32 = arith.constant 0 : i32
    %c0_i32_0 = arith.constant 0 : i32
    %c0_i32_1 = arith.constant 0 : i32
    return %c0_i32, %c0_i32_0 : i32, i32
  }
  func.func @transform_5(%arg0: i32) -> (i32, i32) {
    %c0_i32 = arith.constant 0 : i32
    %c0_i32_0 = arith.constant 0 : i32
    return %arg0, %c0_i32 : i32, i32
  }
}

</mosaic_0001>

<llo_original>
// kernel: tpu_custom_call.1
$region0: #{tpu_custom_call.1}
  #allocation0 [shape = 'u32[]', space=smem, size = 0x4, offset = 0x4, fixed_abs, tag = 'smem constant byte address 0x4 - core index']
  #allocation1 [shape = 'u32[144,128]{1,0:T(1,128)}', space=vmem, size = 0x12000, scoped, tag = 'internal scratch']
  %s0 = inlined_call_operand.hbm [shape: f32[16,64], index: 0, kind: input, shape index: {}]
  %s1 = inlined_call_operand.hbm [shape: f32[64,512], index: 1, kind: input, shape index: {}]
  %s2 = inlined_call_operand.vmem [shape: f32[1,512], index: 2, kind: input, shape index: {}]
  %s3 = inlined_call_operand.hbm [shape: f32[512,256], index: 3, kind: input, shape index: {}]
  %s4 = inlined_call_operand.vmem [shape: f32[1,256], index: 4, kind: input, shape index: {}]
  %s5 = inlined_call_operand.hbm [shape: f32[16,256], index: 5, kind: output, shape index: {}]
  %s6 = sld [smem:[#allocation0]]
  $region42: #{tpu_custom_call.1} parent=0
    _
  %s8 = ssub.s32 1, %s6
  %s9 = scalar_select 0, %s8, %s6
  $region1: #{tpu_custom_call.1} parent=0
    #allocation2 [shape = 'u8[8192]{0}', space=vmem, size = 0x2000, scoped, tag = 'input window, operand 0, single buffered']
    #allocation3 [shape = 's32[1]{0}', space=sflag, size = 0x4, scoped, tag = 'scoped memory for tpu_custom_call.1']
    #allocation4 [shape = 's32[1]{0}', space=sflag, size = 0x4, scoped, tag = 'scoped memory for tpu_custom_call.1']
    #allocation5 [shape = 'u8[131072]{0}', space=vmem, size = 0x20000, scoped, tag = 'input window, operand 1, single buffered']
    #allocation6 [shape = 's32[1]{0}', space=sflag, size = 0x4, scoped, tag = 'scoped memory for tpu_custom_call.1']
    #allocation7 [shape = 'u8[524288]{0}', space=vmem, size = 0x80000, scoped, tag = 'input window, operand 3, single buffered']
    #allocation8 [shape = 'u8[16384]{0}', space=vmem, size = 0x4000, scoped, tag = 'output window, operand 0, single buffered']
    %10 = vsyncpa [#allocation3], 0
    %11 = vsyncpa [#allocation6], 0
    %12 = vsyncpa [#allocation4], 0
    // Predicated region
    $region2: #{tpu_custom_call.1} parent=1 // pred_check
      _
    $region3: #{tpu_custom_call.1} parent=1 // pred_check_branch
      %14 = sbr.rel (0) target = $region5
    $region4: #{tpu_custom_call.1} parent=1 // pred_region
      %s16 = ssub.s32 256, 256
      %17 = vsyncadd [#allocation3], %s16
      %s18 = sshll.u32 [#allocation2], 4
      %s19 = int_to_ptr.vmem [resolvable:$true] %s18
      %24 = dma.hbm_to_vmem [thread:$0]  %s0, 256, %s19, [#allocation3], 128, 128, 8
    $region5: #{tpu_custom_call.1} parent=1 // pred_fallthru
      _
    // Predicated region
    $region6: #{tpu_custom_call.1} parent=1 // pred_check
      _
    $region7: #{tpu_custom_call.1} parent=1 // pred_check_branch
      %26 = sbr.rel (0) target = $region9
    $region8: #{tpu_custom_call.1} parent=1 // pred_region
      %s28 = ssub.s32 4096, 4096
      %29 = vsyncadd [#allocation6], %s28
      %s30 = sshll.u32 [#allocation5], 4
      %s31 = int_to_ptr.vmem [resolvable:$true] %s30
      %36 = dma.hbm_to_vmem [thread:$0]  %s1, 4096, %s31, [#allocation6], 512, 512, 32
    $region9: #{tpu_custom_call.1} parent=1 // pred_fallthru
      _
    // Predicated region
    $region10: #{tpu_custom_call.1} parent=1 // pred_check
      _
    $region11: #{tpu_custom_call.1} parent=1 // pred_check_branch
      %38 = sbr.rel (0) target = $region13
    $region12: #{tpu_custom_call.1} parent=1 // pred_region
      _
    $region13: #{tpu_custom_call.1} parent=1 // pred_fallthru
      _
    // Predicated region
    $region14: #{tpu_custom_call.1} parent=1 // pred_check
      _
    $region15: #{tpu_custom_call.1} parent=1 // pred_check_branch
      %40 = sbr.rel (0) target = $region17
    $region16: #{tpu_custom_call.1} parent=1 // pred_region
      %s42 = ssub.s32 16384, 16384
      %43 = vsyncadd [#allocation6], %s42
      %s44 = sshll.u32 [#allocation7], 4
      %s45 = int_to_ptr.vmem [resolvable:$true] %s44
      %50 = dma.hbm_to_vmem [thread:$0]  %s3, 16384, %s45, [#allocation6], 256, 256, 16
    $region17: #{tpu_custom_call.1} parent=1 // pred_fallthru
      _
    // Predicated region
    $region18: #{tpu_custom_call.1} parent=1 // pred_check
      _
    $region19: #{tpu_custom_call.1} parent=1 // pred_check_branch
      %52 = sbr.rel (0) target = $region21
    $region20: #{tpu_custom_call.1} parent=1 // pred_region
      _
    $region21: #{tpu_custom_call.1} parent=1 // pred_fallthru
      _
    // Predicated region
    $region22: #{tpu_custom_call.1} parent=1 // pred_check
      _
    $region23: #{tpu_custom_call.1} parent=1 // pred_check_branch
      %54 = sbr.rel (0) target = $region25
    $region24: #{tpu_custom_call.1} parent=1 // pred_region
      %55 = dma.done [#allocation3], 256
    $region25: #{tpu_custom_call.1} parent=1 // pred_fallthru
      _
    // Predicated region
    $region26: #{tpu_custom_call.1} parent=1 // pred_check
      _
    $region27: #{tpu_custom_call.1} parent=1 // pred_check_branch
      %57 = sbr.rel (0) target = $region29
    $region28: #{tpu_custom_call.1} parent=1 // pred_region
      %58 = dma.done [#allocation6], 4096
    $region29: #{tpu_custom_call.1} parent=1 // pred_fallthru
      _
    // Predicated region
    $region30: #{tpu_custom_call.1} parent=1 // pred_check
      _
    $region31: #{tpu_custom_call.1} parent=1 // pred_check_branch
      %60 = sbr.rel (0) target = $region33
    $region32: #{tpu_custom_call.1} parent=1 // pred_region
      %61 = dma.done [#allocation6], 16384
    $region33: #{tpu_custom_call.1} parent=1 // pred_fallthru
      _
    %v62 = vld [vmem:[#allocation2] sm:$0xff]
    %v63 = vld [vmem:[#allocation2 + $0x8] sm:$0xff]
    %v64 = vld [vmem:[#allocation5] sm:$0xff]
    %v65 = vld [vmem:[#allocation5 + $0x8] sm:$0xff]
    %v66 = vld [vmem:[#allocation5 + $0x10] sm:$0xff]
    %v67 = vld [vmem:[#allocation5 + $0x18] sm:$0xff]
    %v68 = vld [vmem:[#allocation5 + $0x20] sm:$0xff]
    %v69 = vld [vmem:[#allocation5 + $0x28] sm:$0xff]
    %v70 = vld [vmem:[#allocation5 + $0x30] sm:$0xff]
    %v71 = vld [vmem:[#allocation5 + $0x38] sm:$0xff]
    %v72 = vld [vmem:[#allocation5 + $0x40] sm:$0xff]
    %v73 = vld [vmem:[#allocation5 + $0x48] sm:$0xff]
    %v74 = vld [vmem:[#allocation5 + $0x50] sm:$0xff]
    %v75 = vld [vmem:[#allocation5 + $0x58] sm:$0xff]
    %v76 = vld [vmem:[#allocation5 + $0x60] sm:$0xff]
    %v77 = vld [vmem:[#allocation5 + $0x68] sm:$0xff]
    %v78 = vld [vmem:[#allocation5 + $0x70] sm:$0xff]
    %v79 = vld [vmem:[#allocation5 + $0x78] sm:$0xff]
    %v80 = vld [vmem:[#allocation5 + $0x80] sm:$0xff]
    %v81 = vld [vmem:[#allocation5 + $0x88] sm:$0xff]
    %v82 = vld [vmem:[#allocation5 + $0x90] sm:$0xff]
    %v83 = vld [vmem:[#allocation5 + $0x98] sm:$0xff]
    %v84 = vld [vmem:[#allocation5 + $0xa0] sm:$0xff]
    %v85 = vld [vmem:[#allocation5 + $0xa8] sm:$0xff]
    %v86 = vld [vmem:[#allocation5 + $0xb0] sm:$0xff]
    %v87 = vld [vmem:[#allocation5 + $0xb8] sm:$0xff]
    %v88 = vld [vmem:[#allocation5 + $0xc0] sm:$0xff]
    %v89 = vld [vmem:[#allocation5 + $0xc8] sm:$0xff]
    %v90 = vld [vmem:[#allocation5 + $0xd0] sm:$0xff]
    %v91 = vld [vmem:[#allocation5 + $0xd8] sm:$0xff]
    %v92 = vld [vmem:[#allocation5 + $0xe0] sm:$0xff]
    %v93 = vld [vmem:[#allocation5 + $0xe8] sm:$0xff]
    %v94 = vld [vmem:[#allocation5 + $0xf0] sm:$0xff]
    %v95 = vld [vmem:[#allocation5 + $0xf8] sm:$0xff]
    %v96 = vld [vmem:[%s2] sm:$0xf]
    %v98 = vlaneseq
    %v99 = vshrl.u32 %v98, 7
    %v100 = vsub.s32 0, %v99
    %v101 = vrot.slane %v96, %v100
    %v102 = vlaneseq
    %v103 = vshrl.u32 %v102, 7
    %v104 = vsub.s32 1, %v103
    %v105 = vrot.slane %v96, %v104
    %v106 = vlaneseq
    %v107 = vshrl.u32 %v106, 7
    %v108 = vsub.s32 2, %v107
    %v109 = vrot.slane %v96, %v108
    %v110 = vlaneseq
    %v111 = vshrl.u32 %v110, 7
    %v112 = vsub.s32 3, %v111
    %v113 = vrot.slane %v96, %v112
    %vm118 = vcmask 523264
    %v120 = vsel %vm118, %v62, 0
    %v123 = vsel %vm118, %v63, 0
    %125 = vmatprep.subr.mxu0 %v65
    %126 = vmatpush1.msra.mxu0 %v64
    %127 = vmatprep.subr.mxu0 %v69
    %128 = vmatpush1.msra.mxu0 %v68
    %129 = vmatprep.subr.mxu0 %v73
    %130 = vmatpush1.msra.mxu0 %v72
    %131 = vmatprep.subr.mxu0 %v77
    %132 = vmatpush1.msra.mxu0 %v76
    %133 = vmatprep.subr.mxu0 %v81
    %134 = vmatpush1.msra.mxu0 %v80
    %135 = vmatprep.subr.mxu0 %v85
    %136 = vmatpush1.msra.mxu0 %v84
    %137 = vmatprep.subr.mxu0 %v89
    %138 = vmatpush1.msra.mxu0 %v88
    %139 = vmatprep.subr.mxu0 %v93
    %140 = vmatpush1.msra.mxu0 %v92
    %141 = vmatprep.subr.mxu0 0.0
    %142 = vmatpush1.msra.mxu0 0.0
    %143 = vmatprep.subr.mxu0 0.0
    %144 = vmatpush1.msra.mxu0 0.0
    %145 = vmatprep.subr.mxu0 0.0
    %146 = vmatpush1.msra.mxu0 0.0
    %147 = vmatprep.subr.mxu0 0.0
    %148 = vmatpush1.msra.mxu0 0.0
    %149 = vmatprep.subr.mxu0 0.0
    %150 = vmatpush1.msra.mxu0 0.0
    %151 = vmatprep.subr.mxu0 0.0
    %152 = vmatpush1.msra.mxu0 0.0
    %153 = vmatprep.subr.mxu0 0.0
    %154 = vmatpush1.msra.mxu0 0.0
    %155 = vmatprep.subr.mxu0 0.0
    %156 = vmatpush1.msra.mxu0 0.0
    %157 = vmatprep.subr.mxu0 0.0
    %158 = vmatpush1.msra.mxu0 0.0
    %159 = vmatprep.subr.mxu0 0.0
    %160 = vmatpush1.msra.mxu0 0.0
    %161 = vmatprep.subr.mxu0 0.0
    %162 = vmatpush1.msra.mxu0 0.0
    %163 = vmatprep.subr.mxu0 0.0
    %164 = vmatpush1.msra.mxu0 0.0
    %165 = vmatprep.subr.mxu0 0.0
    %166 = vmatpush1.msra.mxu0 0.0
    %167 = vmatprep.subr.mxu0 0.0
    %168 = vmatpush1.msra.mxu0 0.0
    %169 = vmatprep.subr.mxu0 0.0
    %170 = vmatpush1.msra.mxu0 0.0
    %171 = vmatprep.subr.mxu0 0.0
    %172 = vmatpush1.msra.mxu0 0.0
    %173 = vmatprep.subr.mxu0 0.0
    %174 = vmatpush1.msra.mxu0 0.0
    %175 = vmatprep.subr.mxu0 0.0
    %176 = vmatpush1.msra.mxu0 0.0
    %177 = vmatprep.subr.mxu0 0.0
    %178 = vmatpush1.msra.mxu0 0.0
    %179 = vmatprep.subr.mxu0 0.0
    %180 = vmatpush1.msra.mxu0 0.0
    %181 = vmatprep.subr.mxu0 0.0
    %182 = vmatpush1.msra.mxu0 0.0
    %183 = vmatprep.subr.mxu0 0.0
    %184 = vmatpush1.msra.mxu0 0.0
    %185 = vmatprep.subr.mxu0 0.0
    %186 = vmatpush1.msra.mxu0 0.0
    %187 = vmatprep.subr.mxu0 0.0
    %188 = vmatpush1.msra.mxu0 0.0
    %189 = vmatprep.mubr.f32.mxu0 0.0
    %190 = vmatmul.mubr.f32.gmra.mrb[0].mxu0 %v120
    %v191 = vpop.f32.mrb[0].mxu0
    %v192 = vadd.f32 %v101, %v191
    %v193 = vpop.f32.mrb[0].mxu0
    %v194 = vadd.f32 %v105, %v193
    %195 = vmatprep.mubr.f32.mxu0 0.0
    %196 = vmatmul.mubr.f32.gmra.mrb[0].mxu0 %v123
    %v197 = vpop.f32.mrb[0].mxu0
    %v198 = vadd.f32 %v101, %v197
    %v199 = vpop.f32.mrb[0].mxu0
    %v200 = vadd.f32 %v105, %v199
    %201 = vdwg.mxu0
    %202 = vmatprep.subr.mxu0 %v67
    %203 = vmatpush1.msra.mxu0 %v66
    %204 = vmatprep.subr.mxu0 %v71
    %205 = vmatpush1.msra.mxu0 %v70
    %206 = vmatprep.subr.mxu0 %v75
    %207 = vmatpush1.msra.mxu0 %v74
    %208 = vmatprep.subr.mxu0 %v79
    %209 = vmatpush1.msra.mxu0 %v78
    %210 = vmatprep.subr.mxu0 %v83
    %211 = vmatpush1.msra.mxu0 %v82
    %212 = vmatprep.subr.mxu0 %v87
    %213 = vmatpush1.msra.mxu0 %v86
    %214 = vmatprep.subr.mxu0 %v91
    %215 = vmatpush1.msra.mxu0 %v90
    %216 = vmatprep.subr.mxu0 %v95
    %217 = vmatpush1.msra.mxu0 %v94
    %218 = vmatprep.subr.mxu0 0.0
    %219 = vmatpush1.msra.mxu0 0.0
    %220 = vmatprep.subr.mxu0 0.0
    %221 = vmatpush1.msra.mxu0 0.0
    %222 = vmatprep.subr.mxu0 0.0
    %223 = vmatpush1.msra.mxu0 0.0
    %224 = vmatprep.subr.mxu0 0.0
    %225 = vmatpush1.msra.mxu0 0.0
    %226 = vmatprep.subr.mxu0 0.0
    %227 = vmatpush1.msra.mxu0 0.0
    %228 = vmatprep.subr.mxu0 0.0
    %229 = vmatpush1.msra.mxu0 0.0
    %230 = vmatprep.subr.mxu0 0.0
    %231 = vmatpush1.msra.mxu0 0.0
    %232 = vmatprep.subr.mxu0 0.0
    %233 = vmatpush1.msra.mxu0 0.0
    %234 = vmatprep.subr.mxu0 0.0
    %235 = vmatpush1.msra.mxu0 0.0
    %236 = vmatprep.subr.mxu0 0.0
    %237 = vmatpush1.msra.mxu0 0.0
    %238 = vmatprep.subr.mxu0 0.0
    %239 = vmatpush1.msra.mxu0 0.0
    %240 = vmatprep.subr.mxu0 0.0
    %241 = vmatpush1.msra.mxu0 0.0
    %242 = vmatprep.subr.mxu0 0.0
    %243 = vmatpush1.msra.mxu0 0.0
    %244 = vmatprep.subr.mxu0 0.0
    %245 = vmatpush1.msra.mxu0 0.0
    %246 = vmatprep.subr.mxu0 0.0
    %247 = vmatpush1.msra.mxu0 0.0
    %248 = vmatprep.subr.mxu0 0.0
    %249 = vmatpush1.msra.mxu0 0.0
    %250 = vmatprep.subr.mxu0 0.0
    %251 = vmatpush1.msra.mxu0 0.0
    %252 = vmatprep.subr.mxu0 0.0
    %253 = vmatpush1.msra.mxu0 0.0
    %254 = vmatprep.subr.mxu0 0.0
    %255 = vmatpush1.msra.mxu0 0.0
    %256 = vmatprep.subr.mxu0 0.0
    %257 = vmatpush1.msra.mxu0 0.0
    %258 = vmatprep.subr.mxu0 0.0
    %259 = vmatpush1.msra.mxu0 0.0
    %260 = vmatprep.subr.mxu0 0.0
    %261 = vmatpush1.msra.mxu0 0.0
    %262 = vmatprep.subr.mxu0 0.0
    %263 = vmatpush1.msra.mxu0 0.0
    %264 = vmatprep.subr.mxu0 0.0
    %265 = vmatpush1.msra.mxu0 0.0
    %266 = vmatprep.mubr.f32.mxu0 0.0
    %267 = vmatmul.mubr.f32.gmra.mrb[0].mxu0 %v120
    %v268 = vpop.f32.mrb[0].mxu0
    %v269 = vadd.f32 %v109, %v268
    %v270 = vpop.f32.mrb[0].mxu0
    %v271 = vadd.f32 %v113, %v270
    %272 = vmatprep.mubr.f32.mxu0 0.0
    %273 = vmatmul.mubr.f32.gmra.mrb[0].mxu0 %v123
    %v274 = vpop.f32.mrb[0].mxu0
    %v275 = vadd.f32 %v109, %v274
    %v276 = vpop.f32.mrb[0].mxu0
    %v277 = vadd.f32 %v113, %v276
    %278 = vdwg.mxu0
    %v279 = vmax.f32 %v192, 0.0
    %v280 = vmax.f32 %v194, 0.0
    %v281 = vmax.f32 %v269, 0.0
    %v282 = vmax.f32 %v271, 0.0
    %v283 = vmax.f32 %v198, 0.0
    %v284 = vmax.f32 %v200, 0.0
    %v285 = vmax.f32 %v275, 0.0
    %v286 = vmax.f32 %v277, 0.0
    %v287 = vld [vmem:[#allocation7] sm:$0xff]
    %v288 = vld [vmem:[#allocation7 + $0x8] sm:$0xff]
    %v289 = vld [vmem:[#allocation7 + $0x10] sm:$0xff]
    %v290 = vld [vmem:[#allocation7 + $0x18] sm:$0xff]
    %v291 = vld [vmem:[#allocation7 + $0x20] sm:$0xff]
    %v292 = vld [vmem:[#allocation7 + $0x28] sm:$0xff]
    %v293 = vld [vmem:[#allocation7 + $0x30] sm:$0xff]
    %v294 = vld [vmem:[#allocation7 + $0x38] sm:$0xff]
    %v295 = vld [vmem:[#allocation7 + $0x40] sm:$0xff]
    %v296 = vld [vmem:[#allocation7 + $0x48] sm:$0xff]
    %v297 = vld [vmem:[#allocation7 + $0x50] sm:$0xff]
    %v298 = vld [vmem:[#allocation7 + $0x58] sm:$0xff]
    %v299 = vld [vmem:[#allocation7 + $0x60] sm:$0xff]
    %v300 = vld [vmem:[#allocation7 + $0x68] sm:$0xff]
    %v301 = vld [vmem:[#allocation7 + $0x70] sm:$0xff]
    %v302 = vld [vmem:[#allocation7 + $0x78] sm:$0xff]
    %v303 = vld [vmem:[#allocation7 + $0x80] sm:$0xff]
    %v304 = vld [vmem:[#allocation7 + $0x88] sm:$0xff]
    %v305 = vld [vmem:[#allocation7 + $0x90] sm:$0xff]
    %v306 = vld [vmem:[#allocation7 + $0x98] sm:$0xff]
    %v307 = vld [vmem:[#allocation7 + $0xa0] sm:$0xff]
    %v308 = vld [vmem:[#allocation7 + $0xa8] sm:$0xff]
    %v309 = vld [vmem:[#allocation7 + $0xb0] sm:$0xff]
    %v310 = vld [vmem:[#allocation7 + $0xb8] sm:$0xff]
    %v311 = vld [vmem:[#allocation7 + $0xc0] sm:$0xff]
    %v312 = vld [vmem:[#allocation7 + $0xc8] sm:$0xff]
    %v313 = vld [vmem:[#allocation7 + $0xd0] sm:$0xff]
    %v314 = vld [vmem:[#allocation7 + $0xd8] sm:$0xff]
    %v315 = vld [vmem:[#allocation7 + $0xe0] sm:$0xff]
    %v316 = vld [vmem:[#allocation7 + $0xe8] sm:$0xff]
    %v317 = vld [vmem:[#allocation7 + $0xf0] sm:$0xff]
    %v318 = vld [vmem:[#allocation7 + $0xf8] sm:$0xff]
    %v319 = vld [vmem:[#allocation7 + $0x100] sm:$0xff]
    %v320 = vld [vmem:[#allocation7 + $0x108] sm:$0xff]
    %v321 = vld [vmem:[#allocation7 + $0x110] sm:$0xff]
    %v322 = vld [vmem:[#allocation7 + $0x118] sm:$0xff]
    %v323 = vld [vmem:[#allocation7 + $0x120] sm:$0xff]
    %v324 = vld [vmem:[#allocation7 + $0x128] sm:$0xff]
    %v325 = vld [vmem:[#allocation7 + $0x130] sm:$0xff]
    %v326 = vld [vmem:[#allocation7 + $0x138] sm:$0xff]
    %v327 = vld [vmem:[#allocation7 + $0x140] sm:$0xff]
    %v328 = vld [vmem:[#allocation7 + $0x148] sm:$0xff]
    %v329 = vld [vmem:[#allocation7 + $0x150] sm:$0xff]
    %v330 = vld [vmem:[#allocation7 + $0x158] sm:$0xff]
    %v331 = vld [vmem:[#allocation7 + $0x160] sm:$0xff]
    %v332 = vld [vmem:[#allocation7 + $0x168] sm:$0xff]
    %v333 = vld [vmem:[#allocation7 + $0x170] sm:$0xff]
    %v334 = vld [vmem:[#allocation7 + $0x178] sm:$0xff]
    %v335 = vld [vmem:[#allocation7 + $0x180] sm:$0xff]
    %v336 = vld [vmem:[#allocation7 + $0x188] sm:$0xff]
    %v337 = vld [vmem:[#allocation7 + $0x190] sm:$0xff]
    %v338 = vld [vmem:[#allocation7 + $0x198] sm:$0xff]
    %v339 = vld [vmem:[#allocation7 + $0x1a0] sm:$0xff]
    %v340 = vld [vmem:[#allocation7 + $0x1a8] sm:$0xff]
    %v341 = vld [vmem:[#allocation7 + $0x1b0] sm:$0xff]
    %v342 = vld [vmem:[#allocation7 + $0x1b8] sm:$0xff]
    %v343 = vld [vmem:[#allocation7 + $0x1c0] sm:$0xff]
    %v344 = vld [vmem:[#allocation7 + $0x1c8] sm:$0xff]
    %v345 = vld [vmem:[#allocation7 + $0x1d0] sm:$0xff]
    %v346 = vld [vmem:[#allocation7 + $0x1d8] sm:$0xff]
    %v347 = vld [vmem:[#allocation7 + $0x1e0] sm:$0xff]
    %v348 = vld [vmem:[#allocation7 + $0x1e8] sm:$0xff]
    %v349 = vld [vmem:[#allocation7 + $0x1f0] sm:$0xff]
    %v350 = vld [vmem:[#allocation7 + $0x1f8] sm:$0xff]
    %v351 = vld [vmem:[#allocation7 + $0x200] sm:$0xff]
    %v352 = vld [vmem:[#allocation7 + $0x208] sm:$0xff]
    %v353 = vld [vmem:[#allocation7 + $0x210] sm:$0xff]
    %v354 = vld [vmem:[#allocation7 + $0x218] sm:$0xff]
    %v355 = vld [vmem:[#allocation7 + $0x220] sm:$0xff]
    %v356 = vld [vmem:[#allocation7 + $0x228] sm:$0xff]
    %v357 = vld [vmem:[#allocation7 + $0x230] sm:$0xff]
    %v358 = vld [vmem:[#allocation7 + $0x238] sm:$0xff]
    %v359 = vld [vmem:[#allocation7 + $0x240] sm:$0xff]
    %v360 = vld [vmem:[#allocation7 + $0x248] sm:$0xff]
    %v361 = vld [vmem:[#allocation7 + $0x250] sm:$0xff]
    %v362 = vld [vmem:[#allocation7 + $0x258] sm:$0xff]
    %v363 = vld [vmem:[#allocation7 + $0x260] sm:$0xff]
    %v364 = vld [vmem:[#allocation7 + $0x268] sm:$0xff]
    %v365 = vld [vmem:[#allocation7 + $0x270] sm:$0xff]
    %v366 = vld [vmem:[#allocation7 + $0x278] sm:$0xff]
    %v367 = vld [vmem:[#allocation7 + $0x280] sm:$0xff]
    %v368 = vld [vmem:[#allocation7 + $0x288] sm:$0xff]
    %v369 = vld [vmem:[#allocation7 + $0x290] sm:$0xff]
    %v370 = vld [vmem:[#allocation7 + $0x298] sm:$0xff]
    %v371 = vld [vmem:[#allocation7 + $0x2a0] sm:$0xff]
    %v372 = vld [vmem:[#allocation7 + $0x2a8] sm:$0xff]
    %v373 = vld [vmem:[#allocation7 + $0x2b0] sm:$0xff]
    %v374 = vld [vmem:[#allocation7 + $0x2b8] sm:$0xff]
    %v375 = vld [vmem:[#allocation7 + $0x2c0] sm:$0xff]
    %v376 = vld [vmem:[#allocation7 + $0x2c8] sm:$0xff]
    %v377 = vld [vmem:[#allocation7 + $0x2d0] sm:$0xff]
    %v378 = vld [vmem:[#allocation7 + $0x2d8] sm:$0xff]
    %v379 = vld [vmem:[#allocation7 + $0x2e0] sm:$0xff]
    %v380 = vld [vmem:[#allocation7 + $0x2e8] sm:$0xff]
    %v381 = vld [vmem:[#allocation7 + $0x2f0] sm:$0xff]
    %v382 = vld [vmem:[#allocation7 + $0x2f8] sm:$0xff]
    %v383 = vld [vmem:[#allocation7 + $0x300] sm:$0xff]
    %v384 = vld [vmem:[#allocation7 + $0x308] sm:$0xff]
    %v385 = vld [vmem:[#allocation7 + $0x310] sm:$0xff]
    %v386 = vld [vmem:[#allocation7 + $0x318] sm:$0xff]
    %v387 = vld [vmem:[#allocation7 + $0x320] sm:$0xff]
    %v388 = vld [vmem:[#allocation7 + $0x328] sm:$0xff]
    %v389 = vld [vmem:[#allocation7 + $0x330] sm:$0xff]
    %v390 = vld [vmem:[#allocation7 + $0x338] sm:$0xff]
    %v391 = vld [vmem:[#allocation7 + $0x340] sm:$0xff]
    %v392 = vld [vmem:[#allocation7 + $0x348] sm:$0xff]
    %v393 = vld [vmem:[#allocation7 + $0x350] sm:$0xff]
    %v394 = vld [vmem:[#allocation7 + $0x358] sm:$0xff]
    %v395 = vld [vmem:[#allocation7 + $0x360] sm:$0xff]
    %v396 = vld [vmem:[#allocation7 + $0x368] sm:$0xff]
    %v397 = vld [vmem:[#allocation7 + $0x370] sm:$0xff]
    %v398 = vld [vmem:[#allocation7 + $0x378] sm:$0xff]
    %v399 = vld [vmem:[#allocation7 + $0x380] sm:$0xff]
    %v400 = vld [vmem:[#allocation7 + $0x388] sm:$0xff]
    %v401 = vld [vmem:[#allocation7 + $0x390] sm:$0xff]
    %v402 = vld [vmem:[#allocation7 + $0x398] sm:$0xff]
    %v403 = vld [vmem:[#allocation7 + $0x3a0] sm:$0xff]
    %v404 = vld [vmem:[#allocation7 + $0x3a8] sm:$0xff]
    %v405 = vld [vmem:[#allocation7 + $0x3b0] sm:$0xff]
    %v406 = vld [vmem:[#allocation7 + $0x3b8] sm:$0xff]
    %v407 = vld [vmem:[#allocation7 + $0x3c0] sm:$0xff]
    %v408 = vld [vmem:[#allocation7 + $0x3c8] sm:$0xff]
    %v409 = vld [vmem:[#allocation7 + $0x3d0] sm:$0xff]
    %v410 = vld [vmem:[#allocation7 + $0x3d8] sm:$0xff]
    %v411 = vld [vmem:[#allocation7 + $0x3e0] sm:$0xff]
    %v412 = vld [vmem:[#allocation7 + $0x3e8] sm:$0xff]
    %v413 = vld [vmem:[#allocation7 + $0x3f0] sm:$0xff]
    %v414 = vld [vmem:[#allocation7 + $0x3f8] sm:$0xff]
    %v415 = vld [vmem:[%s4] sm:$0x3]
    %v417 = vlaneseq
    %v418 = vshrl.u32 %v417, 7
    %v419 = vsub.s32 0, %v418
    %v420 = vrot.slane %v415, %v419
    %v421 = vlaneseq
    %v422 = vshrl.u32 %v421, 7
    %v423 = vsub.s32 1, %v422
    %v424 = vrot.slane %v415, %v423
    %427 = vmatprep.subr.mxu0 %v288
    %428 = vmatpush1.msra.mxu0 %v287
    %429 = vmatprep.subr.mxu0 %v290
    %430 = vmatpush1.msra.mxu0 %v289
    %431 = vmatprep.subr.mxu0 %v292
    %432 = vmatpush1.msra.mxu0 %v291
    %433 = vmatprep.subr.mxu0 %v294
    %434 = vmatpush1.msra.mxu0 %v293
    %435 = vmatprep.subr.mxu0 %v296
    %436 = vmatpush1.msra.mxu0 %v295
    %437 = vmatprep.subr.mxu0 %v298
    %438 = vmatpush1.msra.mxu0 %v297
    %439 = vmatprep.subr.mxu0 %v300
    %440 = vmatpush1.msra.mxu0 %v299
    %441 = vmatprep.subr.mxu0 %v302
    %442 = vmatpush1.msra.mxu0 %v301
    %443 = vmatprep.subr.mxu0 %v304
    %444 = vmatpush1.msra.mxu0 %v303
    %445 = vmatprep.subr.mxu0 %v306
    %446 = vmatpush1.msra.mxu0 %v305
    %447 = vmatprep.subr.mxu0 %v308
    %448 = vmatpush1.msra.mxu0 %v307
    %449 = vmatprep.subr.mxu0 %v310
    %450 = vmatpush1.msra.mxu0 %v309
    %451 = vmatprep.subr.mxu0 %v312
    %452 = vmatpush1.msra.mxu0 %v311
    %453 = vmatprep.subr.mxu0 %v314
    %454 = vmatpush1.msra.mxu0 %v313
    %455 = vmatprep.subr.mxu0 %v316
    %456 = vmatpush1.msra.mxu0 %v315
    %457 = vmatprep.subr.mxu0 %v318
    %458 = vmatpush1.msra.mxu0 %v317
    %459 = vmatprep.subr.mxu0 %v320
    %460 = vmatpush1.msra.mxu0 %v319
    %461 = vmatprep.subr.mxu0 %v322
    %462 = vmatpush1.msra.mxu0 %v321
    %463 = vmatprep.subr.mxu0 %v324
    %464 = vmatpush1.msra.mxu0 %v323
    %465 = vmatprep.subr.mxu0 %v326
    %466 = vmatpush1.msra.mxu0 %v325
    %467 = vmatprep.subr.mxu0 %v328
    %468 = vmatpush1.msra.mxu0 %v327
    %469 = vmatprep.subr.mxu0 %v330
    %470 = vmatpush1.msra.mxu0 %v329
    %471 = vmatprep.subr.mxu0 %v332
    %472 = vmatpush1.msra.mxu0 %v331
    %473 = vmatprep.subr.mxu0 %v334
    %474 = vmatpush1.msra.mxu0 %v333
    %475 = vmatprep.subr.mxu0 %v336
    %476 = vmatpush1.msra.mxu0 %v335
    %477 = vmatprep.subr.mxu0 %v338
    %478 = vmatpush1.msra.mxu0 %v337
    %479 = vmatprep.subr.mxu0 %v340
    %480 = vmatpush1.msra.mxu0 %v339
    %481 = vmatprep.subr.mxu0 %v342
    %482 = vmatpush1.msra.mxu0 %v341
    %483 = vmatprep.subr.mxu0 %v344
    %484 = vmatpush1.msra.mxu0 %v343
    %485 = vmatprep.subr.mxu0 %v346
    %486 = vmatpush1.msra.mxu0 %v345
    %487 = vmatprep.subr.mxu0 %v348
    %488 = vmatpush1.msra.mxu0 %v347
    %489 = vmatprep.subr.mxu0 %v350
    %490 = vmatpush1.msra.mxu0 %v349
    %491 = vmatprep.mubr.f32.mxu0 %v280
    %492 = vmatmul.mubr.f32.gmra.mrb[0].mxu0 %v279
    %v493 = vpop.f32.mrb[0].mxu0
    %v494 = vadd.f32 %v420, %v493
    %v495 = vpop.f32.mrb[0].mxu0
    %v496 = vadd.f32 %v424, %v495
    %497 = vmatprep.mubr.f32.mxu0 %v284
    %498 = vmatmul.mubr.f32.gmra.mrb[0].mxu0 %v283
    %v499 = vpop.f32.mrb[0].mxu0
    %v500 = vadd.f32 %v420, %v499
    %v501 = vpop.f32.mrb[0].mxu0
    %v502 = vadd.f32 %v424, %v501
    %503 = vdwg.mxu0
    %504 = vmatprep.subr.mxu0 %v352
    %505 = vmatpush1.msra.mxu0 %v351
    %506 = vmatprep.subr.mxu0 %v354
    %507 = vmatpush1.msra.mxu0 %v353
    %508 = vmatprep.subr.mxu0 %v356
    %509 = vmatpush1.msra.mxu0 %v355
    %510 = vmatprep.subr.mxu0 %v358
    %511 = vmatpush1.msra.mxu0 %v357
    %512 = vmatprep.subr.mxu0 %v360
    %513 = vmatpush1.msra.mxu0 %v359
    %514 = vmatprep.subr.mxu0 %v362
    %515 = vmatpush1.msra.mxu0 %v361
    %516 = vmatprep.subr.mxu0 %v364
    %517 = vmatpush1.msra.mxu0 %v363
    %518 = vmatprep.subr.mxu0 %v366
    %519 = vmatpush1.msra.mxu0 %v365
    %520 = vmatprep.subr.mxu0 %v368
    %521 = vmatpush1.msra.mxu0 %v367
    %522 = vmatprep.subr.mxu0 %v370
    %523 = vmatpush1.msra.mxu0 %v369
    %524 = vmatprep.subr.mxu0 %v372
    %525 = vmatpush1.msra.mxu0 %v371
    %526 = vmatprep.subr.mxu0 %v374
    %527 = vmatpush1.msra.mxu0 %v373
    %528 = vmatprep.subr.mxu0 %v376
    %529 = vmatpush1.msra.mxu0 %v375
    %530 = vmatprep.subr.mxu0 %v378
    %531 = vmatpush1.msra.mxu0 %v377
    %532 = vmatprep.subr.mxu0 %v380
    %533 = vmatpush1.msra.mxu0 %v379
    %534 = vmatprep.subr.mxu0 %v382
    %535 = vmatpush1.msra.mxu0 %v381
    %536 = vmatprep.subr.mxu0 %v384
    %537 = vmatpush1.msra.mxu0 %v383
    %538 = vmatprep.subr.mxu0 %v386
    %539 = vmatpush1.msra.mxu0 %v385
    %540 = vmatprep.subr.mxu0 %v388
    %541 = vmatpush1.msra.mxu0 %v387
    %542 = vmatprep.subr.mxu0 %v390
    %543 = vmatpush1.msra.mxu0 %v389
    %544 = vmatprep.subr.mxu0 %v392
    %545 = vmatpush1.msra.mxu0 %v391
    %546 = vmatprep.subr.mxu0 %v394
    %547 = vmatpush1.msra.mxu0 %v393
    %548 = vmatprep.subr.mxu0 %v396
    %549 = vmatpush1.msra.mxu0 %v395
    %550 = vmatprep.subr.mxu0 %v398
    %551 = vmatpush1.msra.mxu0 %v397
    %552 = vmatprep.subr.mxu0 %v400
    %553 = vmatpush1.msra.mxu0 %v399
    %554 = vmatprep.subr.mxu0 %v402
    %555 = vmatpush1.msra.mxu0 %v401
    %556 = vmatprep.subr.mxu0 %v404
    %557 = vmatpush1.msra.mxu0 %v403
    %558 = vmatprep.subr.mxu0 %v406
    %559 = vmatpush1.msra.mxu0 %v405
    %560 = vmatprep.subr.mxu0 %v408
    %561 = vmatpush1.msra.mxu0 %v407
    %562 = vmatprep.subr.mxu0 %v410
    %563 = vmatpush1.msra.mxu0 %v409
    %564 = vmatprep.subr.mxu0 %v412
    %565 = vmatpush1.msra.mxu0 %v411
    %566 = vmatprep.subr.mxu0 %v414
    %567 = vmatpush1.msra.mxu0 %v413
    %568 = vmatprep.mubr.f32.mxu0 %v282
    %569 = vmatmul.mubr.f32.gmra.mrb[0].mxu0 %v281
    %v570 = vpop.f32.mrb[0].mxu0
    %v571 = vadd.f32 %v494, %v570
    %v572 = vpop.f32.mrb[0].mxu0
    %v573 = vadd.f32 %v496, %v572
    %574 = vmatprep.mubr.f32.mxu0 %v286
    %575 = vmatmul.mubr.f32.gmra.mrb[0].mxu0 %v285
    %v576 = vpop.f32.mrb[0].mxu0
    %v577 = vadd.f32 %v500, %v576
    %v578 = vpop.f32.mrb[0].mxu0
    %v579 = vadd.f32 %v502, %v578
    %580 = vdwg.mxu0
    %581 = vst [vmem:[#allocation8] sm:$0xff] %v571
    %582 = vst [vmem:[#allocation8 + $0x8] sm:$0xff] %v573
    %583 = vst [vmem:[#allocation8 + $0x10] sm:$0xff] %v577
    %584 = vst [vmem:[#allocation8 + $0x18] sm:$0xff] %v579
    // Predicated region
    $region34: #{tpu_custom_call.1} parent=1 // pred_check
      _
    $region35: #{tpu_custom_call.1} parent=1 // pred_check_branch
      %586 = sbr.rel (0) target = $region37
    $region36: #{tpu_custom_call.1} parent=1 // pred_region
      %s588 = ssub.s32 512, 512
      %589 = vsyncadd [#allocation4], %s588
      %s590 = sshll.u32 [#allocation8], 4
      %s591 = int_to_ptr.vmem [resolvable:$true] %s590
      %596 = dma.vmem_to_hbm [thread:$0]  %s591, 512, %s5, [#allocation4], 256, 256, 16
    $region37: #{tpu_custom_call.1} parent=1 // pred_fallthru
      _
    // Predicated region
    $region38: #{tpu_custom_call.1} parent=1 // pred_check
      _
    $region39: #{tpu_custom_call.1} parent=1 // pred_check_branch
      %598 = sbr.rel (0) target = $region41
    $region40: #{tpu_custom_call.1} parent=1 // pred_region
      %599 = dma.done [#allocation4], 512
    $region41: #{tpu_custom_call.1} parent=1 // pred_fallthru
      _
    %600 = vsyncpa [#allocation3], 1
    %601 = vsyncpa [#allocation6], 1
    %602 = vsyncpa [#allocation4], 1

</llo_original>
